<compile_context>
chip_gen: v7x
topology: tpu7x:2x2x1
jax: 0.10.0
libtpu: 0.0.40
codegen_flags: <defaults>
</compile_context>

<pallas_src>
import jax
import jax.numpy as jnp
from jax.experimental import pallas as pl
from jax.experimental.pallas import tpu as pltpu


def _round_up(n, m):
    return ((n + m - 1) // m) * m


def _choose_tile(batch, tile_b):
    """Pick a lane-aligned batch tile; prefer >=2 grid steps for v7x megacore."""
    b128 = _round_up(max(batch, 1), 128)
    n_steps = pl.cdiv(b128, tile_b)
    if b128 >= 256:
        n_steps = max(n_steps, 2)          # engage both v7x TensorCores
    tb = _round_up(pl.cdiv(b128, n_steps), 128)
    b_pad = _round_up(b128, tb)
    return tb, b_pad


def critic_kernel(xT_ref, w1t_ref, b1_ref, w2t_ref, b2_ref, wv_ref, bv_ref, v_ref):
    """One batch tile, batch on lanes:
       h1^T = leaky(W1 @ x^T + b1); h2^T = leaky(W2 @ h1^T + b2); v = wv . h2^T + bv."""
    xT = xT_ref[...]                      # (4, TB)   f32
    w1t = w1t_ref[...]                    # (128, 4)  f32

    # --- fc1 (K=4): 4 VPU broadcast-FMAs in f32; keeps the MXU free for fc2 --
    h1 = (w1t[:, 0:1] * xT[0:1, :]
          + w1t[:, 1:2] * xT[1:2, :]
          + w1t[:, 2:3] * xT[2:3, :]
          + w1t[:, 3:4] * xT[3:4, :]
          + b1_ref[...])                  # (128, TB)
    h1 = jnp.maximum(h1, 0.01 * h1)       # leaky_relu, slope 0.01 (2 VALU ops)

    # --- fc2: the one MXU matmul; operands in W2^T's dtype (bf16 fast path /
    #     f32 reference path), f32 accumulation -------------------------------
    h2 = jnp.dot(w2t_ref[...], h1.astype(w2t_ref.dtype),
                 preferred_element_type=jnp.float32) + b2_ref[...]   # (64, TB)
    h2 = jnp.maximum(h2, 0.01 * h2)       # leaky_relu, slope 0.01

    # --- value head (N=1): f32 VPU multiply + 64-sublane reduction (XLU),
    #     scalar bias from SMEM; output row is lane-dense ---------------------
    v_ref[...] = (jnp.sum(h2 * wv_ref[...], axis=0, keepdims=True)
                  + bv_ref[0, 0])         # (1, TB)


def critic_forward(x, params, *, tile_b=8192, use_bf16_mxu=True):
    """x: (B, 4) float32 -> v: (B, 1) float32."""
    w1, b1, w2, b2, wv, bv = params
    B = x.shape[0]

    # Kernel-layout parameter prep (features-major, batch on lanes).
    w1t = w1.T                                        # (128, 4)
    b1c = b1.T                                        # (128, 1)
    w2t = w2.T                                        # (64, 128)
    if use_bf16_mxu:
        w2t = w2t.astype(jnp.bfloat16)                # MXU-native; f32 accumulate
    b2c = b2.T                                        # (64, 1)
    # wv is already (64, 1); bv (1, 1) lives in SMEM.

    tb, b_pad = _choose_tile(B, tile_b)
    xT = x.T                                          # (4, B), batch on lanes
    if b_pad != B:
        xT = jnp.pad(xT, ((0, 0), (0, b_pad - B)))
    grid = (b_pad // tb,)

    out = pl.pallas_call(
        critic_kernel,
        out_shape=jax.ShapeDtypeStruct((1, b_pad), jnp.float32),
        grid_spec=pltpu.PrefetchScalarGridSpec(
            num_scalar_prefetch=0,
            grid=grid,
            in_specs=[
                pl.BlockSpec((4, tb), lambda i: (0, i)),        # x^T: batch-tiled, lane-dense
                pl.BlockSpec((128, 4), lambda i: (0, 0)),       # W1^T: resident
                pl.BlockSpec((128, 1), lambda i: (0, 0)),       # b1 column: resident
                pl.BlockSpec((64, 128), lambda i: (0, 0)),      # W2^T (bf16/f32): resident
                pl.BlockSpec((64, 1), lambda i: (0, 0)),        # b2 column: resident
                pl.BlockSpec((64, 1), lambda i: (0, 0)),        # wv column: resident
                pl.BlockSpec(memory_space=pltpu.MemorySpace.SMEM),  # bv scalar in SMEM
            ],
            out_specs=pl.BlockSpec((1, tb), lambda i: (0, i)),  # lane-dense value row
        ),
        compiler_params=pltpu.CompilerParams(
            dimension_semantics=("parallel",),
            vmem_limit_bytes=48 * 1024 * 1024,       # headroom under v7x's 64 MiB/TC
        ),
    )(xT, w1t, b1c, w2t, b2c, wv, bv)

    return out[:, :B].T                               # back to (B, 1)


def init_params(key):
    """Deterministic parameter init mirroring the PyTorch __init__ shapes/inits."""
    k1, k2, kwv, kb1, kb2, kbv = jax.random.split(key, 6)

    # kaiming_normal_ (fan_in, leaky_relu a=0 gain -> sqrt(2/fan_in))
    def kaiming(k, fan_in, fan_out):
        std = jnp.sqrt(2.0 / fan_in)
        # stored as (in, out) = transpose of torch's (out, in) weight
        return jax.random.normal(k, (fan_in, fan_out), jnp.float32) * std

    def torch_linear_bias(k, fan_in, fan_out):
        bound = 1.0 / jnp.sqrt(fan_in)
        return jax.random.uniform(k, (1, fan_out), jnp.float32, -bound, bound)

    w1 = kaiming(k1, 4, 128)
    b1 = torch_linear_bias(kb1, 4, 128)
    w2 = kaiming(k2, 128, 64)
    b2 = torch_linear_bias(kb2, 128, 64)
    # fc3 (64 -> 64) exists in the module but is unused in forward(); omitted.
    wv = jax.random.uniform(kwv, (64, 1), jnp.float32, -0.003, 0.003)
    bv = jax.random.uniform(kbv, (1, 1), jnp.float32, -0.003, 0.003)
    return (w1, b1, w2, b2, wv, bv)


def critic_ref(x, params):
    """Pure-JAX f32 reference (full-precision dots) for correctness checks."""
    w1, b1, w2, b2, wv, bv = params
    hp = jax.lax.Precision.HIGHEST
    h1 = jnp.dot(x, w1, precision=hp) + b1
    h1 = jnp.where(h1 > 0, h1, 0.01 * h1)
    h2 = jnp.dot(h1, w2, precision=hp) + b2
    h2 = jnp.where(h2 > 0, h2, 0.01 * h2)
    return jnp.dot(h2, wv, precision=hp) + bv


if __name__ == "__main__":
    key = jax.random.PRNGKey(0)
    kp, kx = jax.random.split(key)

    params = init_params(kp)
    B = 200  # not a multiple of 128: exercises lane padding and a 2-step grid
    x = jax.random.normal(kx, (B, 4), jnp.float32)

    v_expected = critic_ref(x, params)

    # bf16-MXU fast path (default) over a 2-step "parallel" grid.
    v_fast = jax.block_until_ready(critic_forward(x, params))
    # pure-f32 MXU path (tight correctness check).
    v_f32 = jax.block_until_ready(critic_forward(x, params, use_bf16_mxu=False))
    # tiny batch: single 128-lane tile with heavy tail padding.
    v_small = jax.block_until_ready(critic_forward(x[:2], params))

    assert v_fast.shape == (B, 1) and v_f32.shape == (B, 1) and v_small.shape == (2, 1)
    assert jnp.allclose(v_f32, v_expected, atol=1e-4, rtol=1e-2), "f32 path mismatch"
    assert jnp.allclose(v_fast, v_expected, atol=5e-3, rtol=5e-2), "bf16 path mismatch"
    assert jnp.allclose(v_small, v_expected[:2], atol=5e-3, rtol=5e-2), "small-batch mismatch"

    print("KERNEL_OK")
</pallas_src>

<mosaic_0001>
module attributes {stable_mosaic.version = 11 : i64} {
  func.func @critic_kernel(%arg0: i32, %arg1: memref<4x128xf32, #tpu.memory_space<vmem>>, %arg2: memref<128x4xf32, #tpu.memory_space<vmem>>, %arg3: memref<128x1xf32, #tpu.memory_space<vmem>>, %arg4: memref<64x128xbf16, #tpu.memory_space<vmem>>, %arg5: memref<64x1xf32, #tpu.memory_space<vmem>>, %arg6: memref<64x1xf32, #tpu.memory_space<vmem>>, %arg7: memref<1x1xf32, #tpu.memory_space<smem>>, %arg8: memref<1x128xf32, #tpu.memory_space<vmem>>) attributes {dimension_semantics = [#tpu.dimension_semantics<parallel>], iteration_bounds = array<i64: 2>, scalar_prefetch = 0 : i64, scratch_operands = 0 : i64, tpu.core_type = #tpu.core_type<tc>, window_params = [{transform_indices = @transform_0, window_bounds = array<i64: 4, 128>}, {pipeline_mode = #tpu.pipeline_mode<synchronous>, transform_indices = @transform_1, window_bounds = array<i64: 128, 4>}, {pipeline_mode = #tpu.pipeline_mode<synchronous>, transform_indices = @transform_2, window_bounds = array<i64: 128, 1>}, {pipeline_mode = #tpu.pipeline_mode<synchronous>, transform_indices = @transform_3, window_bounds = array<i64: 64, 128>}, {pipeline_mode = #tpu.pipeline_mode<synchronous>, transform_indices = @transform_4, window_bounds = array<i64: 64, 1>}, {pipeline_mode = #tpu.pipeline_mode<synchronous>, transform_indices = @transform_5, window_bounds = array<i64: 64, 1>}, {transform_indices = @transform_6, window_bounds = array<i64: 1, 1>}, {transform_indices = @transform_7, window_bounds = array<i64: 1, 128>}]} {
    %c0 = arith.constant 0 : index
    %c0_0 = arith.constant 0 : index
    %0 = vector.load %arg1[%c0, %c0_0] : memref<4x128xf32, #tpu.memory_space<vmem>>, vector<4x128xf32>
    %c0_1 = arith.constant 0 : index
    %c0_2 = arith.constant 0 : index
    %1 = vector.load %arg2[%c0_1, %c0_2] : memref<128x4xf32, #tpu.memory_space<vmem>>, vector<128x4xf32>
    %2 = vector.extract_strided_slice %1 {offsets = [0, 0], sizes = [128, 1], strides = [1, 1]} : vector<128x4xf32> to vector<128x1xf32>
    %3 = vector.extract_strided_slice %0 {offsets = [0, 0], sizes = [1, 128], strides = [1, 1]} : vector<4x128xf32> to vector<1x128xf32>
    %4 = vector.broadcast %2 : vector<128x1xf32> to vector<128x128xf32>
    %5 = vector.broadcast %3 : vector<1x128xf32> to vector<128x128xf32>
    %6 = arith.mulf %4, %5 : vector<128x128xf32>
    %7 = vector.extract_strided_slice %1 {offsets = [0, 1], sizes = [128, 1], strides = [1, 1]} : vector<128x4xf32> to vector<128x1xf32>
    %8 = vector.extract_strided_slice %0 {offsets = [1, 0], sizes = [1, 128], strides = [1, 1]} : vector<4x128xf32> to vector<1x128xf32>
    %9 = vector.broadcast %7 : vector<128x1xf32> to vector<128x128xf32>
    %10 = vector.broadcast %8 : vector<1x128xf32> to vector<128x128xf32>
    %11 = arith.mulf %9, %10 : vector<128x128xf32>
    %12 = arith.addf %6, %11 : vector<128x128xf32>
    %13 = vector.extract_strided_slice %1 {offsets = [0, 2], sizes = [128, 1], strides = [1, 1]} : vector<128x4xf32> to vector<128x1xf32>
    %14 = vector.extract_strided_slice %0 {offsets = [2, 0], sizes = [1, 128], strides = [1, 1]} : vector<4x128xf32> to vector<1x128xf32>
    %15 = vector.broadcast %13 : vector<128x1xf32> to vector<128x128xf32>
    %16 = vector.broadcast %14 : vector<1x128xf32> to vector<128x128xf32>
    %17 = arith.mulf %15, %16 : vector<128x128xf32>
    %18 = arith.addf %12, %17 : vector<128x128xf32>
    %19 = vector.extract_strided_slice %1 {offsets = [0, 3], sizes = [128, 1], strides = [1, 1]} : vector<128x4xf32> to vector<128x1xf32>
    %20 = vector.extract_strided_slice %0 {offsets = [3, 0], sizes = [1, 128], strides = [1, 1]} : vector<4x128xf32> to vector<1x128xf32>
    %21 = vector.broadcast %19 : vector<128x1xf32> to vector<128x128xf32>
    %22 = vector.broadcast %20 : vector<1x128xf32> to vector<128x128xf32>
    %23 = arith.mulf %21, %22 : vector<128x128xf32>
    %24 = arith.addf %18, %23 : vector<128x128xf32>
    %c0_3 = arith.constant 0 : index
    %c0_4 = arith.constant 0 : index
    %25 = vector.load %arg3[%c0_3, %c0_4] : memref<128x1xf32, #tpu.memory_space<vmem>>, vector<128x1xf32>
    %26 = vector.broadcast %25 : vector<128x1xf32> to vector<128x128xf32>
    %27 = arith.addf %24, %26 : vector<128x128xf32>
    %cst = arith.constant 0.00999999977 : f32
    %28 = vector.broadcast %cst : f32 to vector<128x128xf32>
    %29 = arith.mulf %28, %27 : vector<128x128xf32>
    %30 = arith.maximumf %27, %29 : vector<128x128xf32>
    %c0_5 = arith.constant 0 : index
    %c0_6 = arith.constant 0 : index
    %31 = vector.load %arg4[%c0_5, %c0_6] : memref<64x128xbf16, #tpu.memory_space<vmem>>, vector<64x128xbf16>
    %32 = arith.truncf %30 : vector<128x128xf32> to vector<128x128xbf16>
    %cst_7 = arith.constant dense<0.000000e+00> : vector<64x128xf32>
    %33 = tpu.matmul %31, %32, %cst_7 {dimension_numbers = #tpu.dot_dimension_numbers<[1], [0], [0], [1], [0, 0, 1, 1], [], []>} : vector<64x128xbf16>, vector<128x128xbf16>, vector<64x128xf32> -> vector<64x128xf32>
    %c0_8 = arith.constant 0 : index
    %c0_9 = arith.constant 0 : index
    %34 = vector.load %arg5[%c0_8, %c0_9] : memref<64x1xf32, #tpu.memory_space<vmem>>, vector<64x1xf32>
    %35 = vector.broadcast %34 : vector<64x1xf32> to vector<64x128xf32>
    %36 = arith.addf %33, %35 : vector<64x128xf32>
    %cst_10 = arith.constant 0.00999999977 : f32
    %37 = vector.broadcast %cst_10 : f32 to vector<64x128xf32>
    %38 = arith.mulf %37, %36 : vector<64x128xf32>
    %39 = arith.maximumf %36, %38 : vector<64x128xf32>
    %c0_11 = arith.constant 0 : index
    %c0_12 = arith.constant 0 : index
    %40 = vector.load %arg6[%c0_11, %c0_12] : memref<64x1xf32, #tpu.memory_space<vmem>>, vector<64x1xf32>
    %41 = vector.broadcast %40 : vector<64x1xf32> to vector<64x128xf32>
    %42 = arith.mulf %39, %41 : vector<64x128xf32>
    %cst_13 = arith.constant dense<0.000000e+00> : vector<128xf32>
    %43 = vector.multi_reduction <add>, %42, %cst_13 [0] : vector<64x128xf32> to vector<128xf32>
    %44 = vector.shape_cast %43 : vector<128xf32> to vector<1x128xf32>
    %c0_14 = arith.constant 0 : index
    %c0_15 = arith.constant 0 : index
    %45 = memref.load %arg7[%c0_14, %c0_15] : memref<1x1xf32, #tpu.memory_space<smem>>
    %46 = vector.broadcast %45 : f32 to vector<1x128xf32>
    %47 = arith.addf %44, %46 : vector<1x128xf32>
    %c0_16 = arith.constant 0 : index
    %c0_17 = arith.constant 0 : index
    %48 = vector.load %arg8[%c0_16, %c0_17] : memref<1x128xf32, #tpu.memory_space<vmem>>, vector<1x128xf32>
    tpu.vector_store %arg8[%c0_16, %c0_17], %47 {strides = array<i32>} : memref<1x128xf32, #tpu.memory_space<vmem>>, vector<1x128xf32>,
    return
  }
  func.func @transform_0(%arg0: i32) -> (i32, i32) {
    %c0_i32 = arith.constant 0 : i32
    %c0_i32_0 = arith.constant 0 : i32
    return %c0_i32, %arg0 : i32, i32
  }
  func.func @transform_1(%arg0: i32) -> (i32, i32) {
    %c0_i32 = arith.constant 0 : i32
    %c0_i32_0 = arith.constant 0 : i32
    %c0_i32_1 = arith.constant 0 : i32
    return %c0_i32, %c0_i32_0 : i32, i32
  }
  func.func @transform_2(%arg0: i32) -> (i32, i32) {
    %c0_i32 = arith.constant 0 : i32
    %c0_i32_0 = arith.constant 0 : i32
    %c0_i32_1 = arith.constant 0 : i32
    return %c0_i32, %c0_i32_0 : i32, i32
  }
  func.func @transform_3(%arg0: i32) -> (i32, i32) {
    %c0_i32 = arith.constant 0 : i32
    %c0_i32_0 = arith.constant 0 : i32
    %c0_i32_1 = arith.constant 0 : i32
    return %c0_i32, %c0_i32_0 : i32, i32
  }
  func.func @transform_4(%arg0: i32) -> (i32, i32) {
    %c0_i32 = arith.constant 0 : i32
    %c0_i32_0 = arith.constant 0 : i32
    %c0_i32_1 = arith.constant 0 : i32
    return %c0_i32, %c0_i32_0 : i32, i32
  }
  func.func @transform_5(%arg0: i32) -> (i32, i32) {
    %c0_i32 = arith.constant 0 : i32
    %c0_i32_0 = arith.constant 0 : i32
    %c0_i32_1 = arith.constant 0 : i32
    return %c0_i32, %c0_i32_0 : i32, i32
  }
  func.func @transform_6(%arg0: i32) -> (i32, i32) {
    %c0_i32 = arith.constant 0 : i32
    %c0_i32_0 = arith.constant 0 : i32
    %c0_i32_1 = arith.constant 0 : i32
    return %c0_i32, %c0_i32_0 : i32, i32
  }
  func.func @transform_7(%arg0: i32) -> (i32, i32) {
    %c0_i32 = arith.constant 0 : i32
    %c0_i32_0 = arith.constant 0 : i32
    return %c0_i32, %arg0 : i32, i32
  }
}

</mosaic_0001>

<llo_original>
// kernel: tpu_custom_call.1
$region0: #{tpu_custom_call.1}
  #allocation0 [shape = 'u32[]', space=smem, size = 0x4, offset = 0x4, fixed_abs, tag = 'smem constant byte address 0x4 - core index']
  #allocation1 [shape = 'u32[144,128]{1,0:T(1,128)}', space=vmem, size = 0x12000, scoped, tag = 'internal scratch']
  #allocation2 [shape = 'f32[1,1]{1,0:T(1,128)S(6)}', space=smem, size = 0x200, scoped, tag = 'scoped memory for tpu_custom_call.1']
  %s0 = inlined_call_operand.vmem [shape: f32[4,256], index: 0, kind: input, shape index: {}]
  %s1 = inlined_call_operand.vmem [shape: f32[128,4], index: 1, kind: input, shape index: {}]
  %s2 = inlined_call_operand.vmem [shape: f32[128,1], index: 2, kind: input, shape index: {}]
  %s3 = inlined_call_operand.vmem [shape: bf16[64,128], index: 3, kind: input, shape index: {}]
  %s4 = inlined_call_operand.vmem [shape: f32[64,1], index: 4, kind: input, shape index: {}]
  %s5 = inlined_call_operand.vmem [shape: f32[64,1], index: 5, kind: input, shape index: {}]
  %s6 = inlined_call_operand.<no memory space> [shape: f32[1,1], index: 6, kind: input, shape index: {}]
  %s7 = inlined_call_operand.hbm [shape: f32[1,256], index: 7, kind: output, shape index: {}]
  %s8 = sld [smem:[#allocation0]]
  $region61: #{tpu_custom_call.1} parent=0
    _
  %s10 = ssub.s32 1, %s8
  %s11 = scalar_select 0, %s10, %s8
  %12 = sst [smem:[#allocation2]] %s6
  $region1: #{tpu_custom_call.1} parent=0
    #allocation3 [shape = 'u8[1024]{0}', space=vmem, size = 0x400, scoped, tag = 'output window, operand 0']
    #allocation4 [shape = 's32[2]{0}', space=sflag, size = 0x8, scoped, tag = 'scoped memory for tpu_custom_call.1']
    %13 = vsyncpa [#allocation4], 0
    %s14 = scalar_lea.sflag [#allocation4], 1
    %15 = vsyncpa %s14, 0
    loop: start=0, step=1, limit=4
    $region2: #{tpu_custom_call.1} parent=1 // loop_pre_header
      _
    $region3: #{tpu_custom_call.1} parent=1 // loop_header
      %s17 = sphi 0, %s21
      %p18 = scmp.ge.s32.totalorder %s17, 4
      %s27 = sphi 0, %s29
      %s30 = sphi 0, %s27
      %s31 = sphi 0, %s30
      %s47 = sphi 0, %s31
      %s51 = sphi 0, %s51
      %s53 = sphi 0, %s51
      %s54 = sphi 0, %s53
      %s68 = sphi 0, %s54
      %s72 = sphi 0, %s72
      %s74 = sphi 0, %s72
      %s75 = sphi 0, %s74
      %s89 = sphi 0, %s75
      %s93 = sphi 0, %s93
      %s95 = sphi 0, %s93
      %s96 = sphi 0, %s95
      %s110 = sphi 0, %s96
      %s114 = sphi 0, %s114
      %s116 = sphi 0, %s114
      %s117 = sphi 0, %s116
      %s131 = sphi 0, %s117
      %s135 = sphi 0, %s135
      %s137 = sphi 0, %s135
      %s138 = sphi 0, %s137
      %s152 = sphi 0, %s138
      %s156 = sphi 0, %s156
      %s158 = sphi 0, %s156
      %s159 = sphi 0, %s158
      %s173 = sphi 0, %s159
      %s179 = sphi 0, %s181
      %s182 = sphi 0, %s179
      %s183 = sphi 0, %s182
      %s199 = sphi 0, %s183
    $region4: #{tpu_custom_call.1} parent=1 // loop_header_branch
      %20 = sbr.rel (%p18) target = $region8
    $region5: #{tpu_custom_call.1} parent=1 // loop_body
      %s22 = ssub.s32 %s17, 1
      %s23 = ssub.s32 %s17, 2
      %s24 = sadd.s32 %s17, 1
      %s25 = ssub.s32 %s17, %s24
      %p26 = scmp.eq.s32.totalorder %s25, 0
      %s28 = sadd.s32 %s27, 1
      %s29 = scalar_select %p26, %s27, %s28
      %p32 = pneg %p26
      %p33 = scmp.eq.s32.totalorder %s17, 1
      %p34 = por %p32, %p33
      %p35 = scmp.ne.s32.totalorder %s27, %s30
      %p36 = scmp.eq.s32.totalorder %s17, 0
      %p37 = por %p35, %p36
      %p38 = scmp.ne.s32.totalorder %s27, %s30
      %p39 = scmp.eq.s32.totalorder %s22, 1
      %p40 = por %p38, %p39
      %p41 = scmp.ne.s32.totalorder %s30, %s31
      %p42 = scmp.eq.s32.totalorder %s22, 0
      %p43 = por %p41, %p42
      %p44 = scmp.ne.s32.totalorder %s30, %s31
      %p45 = scmp.eq.s32.totalorder %s23, 1
      %p46 = por %p44, %p45
      %p48 = scmp.ne.s32.totalorder %s31, %s47
      %p49 = scmp.eq.s32.totalorder %s23, 0
      %p50 = por %p48, %p49
      %s52 = sadd.s32 %s51, 1
      %p55 = scmp.eq.s32.totalorder %s17, 1
      %p56 = scmp.ne.s32.totalorder %s51, %s53
      %p57 = scmp.eq.s32.totalorder %s17, 0
      %p58 = por %p56, %p57
      %p59 = scmp.ne.s32.totalorder %s51, %s53
      %p60 = scmp.eq.s32.totalorder %s22, 1
      %p61 = por %p59, %p60
      %p62 = scmp.ne.s32.totalorder %s53, %s54
      %p63 = scmp.eq.s32.totalorder %s22, 0
      %p64 = por %p62, %p63
      %p65 = scmp.ne.s32.totalorder %s53, %s54
      %p66 = scmp.eq.s32.totalorder %s23, 1
      %p67 = por %p65, %p66
      %p69 = scmp.ne.s32.totalorder %s54, %s68
      %p70 = scmp.eq.s32.totalorder %s23, 0
      %p71 = por %p69, %p70
      %s73 = sadd.s32 %s72, 1
      %p76 = scmp.eq.s32.totalorder %s17, 1
      %p77 = scmp.ne.s32.totalorder %s72, %s74
      %p78 = scmp.eq.s32.totalorder %s17, 0
      %p79 = por %p77, %p78
      %p80 = scmp.ne.s32.totalorder %s72, %s74
      %p81 = scmp.eq.s32.totalorder %s22, 1
      %p82 = por %p80, %p81
      %p83 = scmp.ne.s32.totalorder %s74, %s75
      %p84 = scmp.eq.s32.totalorder %s22, 0
      %p85 = por %p83, %p84
      %p86 = scmp.ne.s32.totalorder %s74, %s75
      %p87 = scmp.eq.s32.totalorder %s23, 1
      %p88 = por %p86, %p87
      %p90 = scmp.ne.s32.totalorder %s75, %s89
      %p91 = scmp.eq.s32.totalorder %s23, 0
      %p92 = por %p90, %p91
      %s94 = sadd.s32 %s93, 1
      %p97 = scmp.eq.s32.totalorder %s17, 1
      %p98 = scmp.ne.s32.totalorder %s93, %s95
      %p99 = scmp.eq.s32.totalorder %s17, 0
      %p100 = por %p98, %p99
      %p101 = scmp.ne.s32.totalorder %s93, %s95
      %p102 = scmp.eq.s32.totalorder %s22, 1
      %p103 = por %p101, %p102
      %p104 = scmp.ne.s32.totalorder %s95, %s96
      %p105 = scmp.eq.s32.totalorder %s22, 0
      %p106 = por %p104, %p105
      %p107 = scmp.ne.s32.totalorder %s95, %s96
      %p108 = scmp.eq.s32.totalorder %s23, 1
      %p109 = por %p107, %p108
      %p111 = scmp.ne.s32.totalorder %s96, %s110
      %p112 = scmp.eq.s32.totalorder %s23, 0
      %p113 = por %p111, %p112
      %s115 = sadd.s32 %s114, 1
      %p118 = scmp.eq.s32.totalorder %s17, 1
      %p119 = scmp.ne.s32.totalorder %s114, %s116
      %p120 = scmp.eq.s32.totalorder %s17, 0
      %p121 = por %p119, %p120
      %p122 = scmp.ne.s32.totalorder %s114, %s116
      %p123 = scmp.eq.s32.totalorder %s22, 1
      %p124 = por %p122, %p123
      %p125 = scmp.ne.s32.totalorder %s116, %s117
      %p126 = scmp.eq.s32.totalorder %s22, 0
      %p127 = por %p125, %p126
      %p128 = scmp.ne.s32.totalorder %s116, %s117
      %p129 = scmp.eq.s32.totalorder %s23, 1
      %p130 = por %p128, %p129
      %p132 = scmp.ne.s32.totalorder %s117, %s131
      %p133 = scmp.eq.s32.totalorder %s23, 0
      %p134 = por %p132, %p133
      %s136 = sadd.s32 %s135, 1
      %p139 = scmp.eq.s32.totalorder %s17, 1
      %p140 = scmp.ne.s32.totalorder %s135, %s137
      %p141 = scmp.eq.s32.totalorder %s17, 0
      %p142 = por %p140, %p141
      %p143 = scmp.ne.s32.totalorder %s135, %s137
      %p144 = scmp.eq.s32.totalorder %s22, 1
      %p145 = por %p143, %p144
      %p146 = scmp.ne.s32.totalorder %s137, %s138
      %p147 = scmp.eq.s32.totalorder %s22, 0
      %p148 = por %p146, %p147
      %p149 = scmp.ne.s32.totalorder %s137, %s138
      %p150 = scmp.eq.s32.totalorder %s23, 1
      %p151 = por %p149, %p150
      %p153 = scmp.ne.s32.totalorder %s138, %s152
      %p154 = scmp.eq.s32.totalorder %s23, 0
      %p155 = por %p153, %p154
      %s157 = sadd.s32 %s156, 1
      %p160 = scmp.eq.s32.totalorder %s17, 1
      %p161 = scmp.ne.s32.totalorder %s156, %s158
      %p162 = scmp.eq.s32.totalorder %s17, 0
      %p163 = por %p161, %p162
      %p164 = scmp.ne.s32.totalorder %s156, %s158
      %p165 = scmp.eq.s32.totalorder %s22, 1
      %p166 = por %p164, %p165
      %p167 = scmp.ne.s32.totalorder %s158, %s159
      %p168 = scmp.eq.s32.totalorder %s22, 0
      %p169 = por %p167, %p168
      %p170 = scmp.ne.s32.totalorder %s158, %s159
      %p171 = scmp.eq.s32.totalorder %s23, 1
      %p172 = por %p170, %p171
      %p174 = scmp.ne.s32.totalorder %s159, %s173
      %p175 = scmp.eq.s32.totalorder %s23, 0
      %p176 = por %p174, %p175
      %s177 = ssub.s32 %s17, %s24
      %p178 = scmp.eq.s32.totalorder %s177, 0
      %s180 = sadd.s32 %s179, 1
      %s181 = scalar_select %p178, %s179, %s180
      %p184 = pneg %p178
      %p185 = scmp.eq.s32.totalorder %s17, 1
      %p186 = por %p184, %p185
      %p187 = scmp.ne.s32.totalorder %s179, %s182
      %p188 = scmp.eq.s32.totalorder %s17, 0
      %p189 = por %p187, %p188
      %p190 = scmp.ne.s32.totalorder %s179, %s182
      %p191 = scmp.eq.s32.totalorder %s22, 1
      %p192 = por %p190, %p191
      %p193 = scmp.ne.s32.totalorder %s182, %s183
      %p194 = scmp.eq.s32.totalorder %s22, 0
      %p195 = por %p193, %p194
      %p196 = scmp.ne.s32.totalorder %s182, %s183
      %p197 = scmp.eq.s32.totalorder %s23, 1
      %p198 = por %p196, %p197
      %p200 = scmp.ne.s32.totalorder %s183, %s199
      %p201 = scmp.eq.s32.totalorder %s23, 0
      %p202 = por %p200, %p201
      %p203 = scmp.le.s32.totalorder 1, %s17
      %p204 = scmp.lt.s32.totalorder %s17, 3
      %p205 = pnand %p203, %p204
      %p206 = pneg %p205
      // Predicated region
      $region9: #{tpu_custom_call.1} parent=5 // pred_check
        _
      $region10: #{tpu_custom_call.1} parent=5 // pred_check_branch
        %208 = sbr.rel (%p205) target = $region12
      $region11: #{tpu_custom_call.1} parent=5 // pred_region
        %s209 = ssub.s32 %s17, 1
        // Predicated region
        $region13: #{tpu_custom_call.1} parent=11 // pred_check
          %p210 = pneg %p64
        $region14: #{tpu_custom_call.1} parent=11 // pred_check_branch
          %212 = sbr.rel (%p210) target = $region16
        $region15: #{tpu_custom_call.1} parent=11 // pred_region
          _
        $region16: #{tpu_custom_call.1} parent=11 // pred_fallthru
          _
        // Predicated region
        $region17: #{tpu_custom_call.1} parent=11 // pred_check
          %p213 = pneg %p85
        $region18: #{tpu_custom_call.1} parent=11 // pred_check_branch
          %215 = sbr.rel (%p213) target = $region20
        $region19: #{tpu_custom_call.1} parent=11 // pred_region
          _
        $region20: #{tpu_custom_call.1} parent=11 // pred_fallthru
          _
        // Predicated region
        $region21: #{tpu_custom_call.1} parent=11 // pred_check
          %p216 = pneg %p106
        $region22: #{tpu_custom_call.1} parent=11 // pred_check_branch
          %218 = sbr.rel (%p216) target = $region24
        $region23: #{tpu_custom_call.1} parent=11 // pred_region
          _
        $region24: #{tpu_custom_call.1} parent=11 // pred_fallthru
          _
        // Predicated region
        $region25: #{tpu_custom_call.1} parent=11 // pred_check
          %p219 = pneg %p127
        $region26: #{tpu_custom_call.1} parent=11 // pred_check_branch
          %221 = sbr.rel (%p219) target = $region28
        $region27: #{tpu_custom_call.1} parent=11 // pred_region
          _
        $region28: #{tpu_custom_call.1} parent=11 // pred_fallthru
          _
        // Predicated region
        $region29: #{tpu_custom_call.1} parent=11 // pred_check
          %p222 = pneg %p148
        $region30: #{tpu_custom_call.1} parent=11 // pred_check_branch
          %224 = sbr.rel (%p222) target = $region32
        $region31: #{tpu_custom_call.1} parent=11 // pred_region
          _
        $region32: #{tpu_custom_call.1} parent=11 // pred_fallthru
          _
        // Predicated region
        $region33: #{tpu_custom_call.1} parent=11 // pred_check
          %p225 = pneg %p169
        $region34: #{tpu_custom_call.1} parent=11 // pred_check_branch
          %227 = sbr.rel (%p225) target = $region36
        $region35: #{tpu_custom_call.1} parent=11 // pred_region
          _
        $region36: #{tpu_custom_call.1} parent=11 // pred_fallthru
          _
      $region12: #{tpu_custom_call.1} parent=5 // pred_fallthru
        _
      %p228 = scmp.lt.s32.totalorder %s17, 2
      // Predicated region
      $region37: #{tpu_custom_call.1} parent=5 // pred_check
        %p229 = pneg %p228
      $region38: #{tpu_custom_call.1} parent=5 // pred_check_branch
        %231 = sbr.rel (%p229) target = $region40
      $region39: #{tpu_custom_call.1} parent=5 // pred_region
        // Predicated region
        $region41: #{tpu_custom_call.1} parent=39 // pred_check
          %p232 = pneg %p37
        $region42: #{tpu_custom_call.1} parent=39 // pred_check_branch
          %234 = sbr.rel (%p232) target = $region44
        $region43: #{tpu_custom_call.1} parent=39 // pred_region
          %p235 = scmp.lt.s32.totalorder %s17, 1
          %s236 = scalar_select %p235, %s17, 1
          %s237 = smul.addr %s236, 4
          %s238 = scalar_lea.vmem %s0, %s237
        $region44: #{tpu_custom_call.1} parent=39 // pred_fallthru
          _
      $region40: #{tpu_custom_call.1} parent=5 // pred_fallthru
        _
      %p239 = scmp.le.s32.totalorder 1, %s17
      %p240 = scmp.lt.s32.totalorder %s17, 3
      %p241 = pnand %p239, %p240
      %p242 = pneg %p241
      // Predicated region
      $region45: #{tpu_custom_call.1} parent=5 // pred_check
        _
      $region46: #{tpu_custom_call.1} parent=5 // pred_check_branch
        %244 = sbr.rel (%p241) target = $region48
      $region47: #{tpu_custom_call.1} parent=5 // pred_region
        %s245 = ssub.s32 %s17, 1
        %p246 = scmp.lt.s32.totalorder %s22, 1
        %s247 = scalar_select %p246, %s22, 1
        %s248 = smul.addr %s247, 4
        %s249 = scalar_lea.vmem %s0, %s248
        %p250 = pneg %p43
        %p251 = pneg %p40
        %p252 = pneg %p64
        %p253 = pneg %p61
        %p254 = pneg %p85
        %p255 = pneg %p82
        %p256 = pneg %p106
        %p257 = pneg %p103
        %p258 = pneg %p127
        %p259 = pneg %p124
        %p260 = pneg %p148
        %p261 = pneg %p145
        %p262 = pneg %p169
        %p263 = pneg %p166
        %p264 = pneg %p195
        %p265 = pneg %p192
        %s266 = sand.u32 %s182, 1
        %s267 = scalar_lea.sflag [#allocation4], %s266
        %s268 = sand.u32 %s182, 1
        %s269 = scalar_lea.vmem [#allocation3], %s268
        %p270 = scmp.lt.s32.totalorder %s22, 1
        %s271 = scalar_select %p270, %s22, 1
        %s272 = smul.addr %s271, 4
        %s273 = scalar_lea.vmem %s0, %s272
        %v275 = vld [vmem:[%s273] sm:$0xf]
        %v276 = vld [vmem:[%s1] sm:$0xff]
        %v277 = vld [vmem:[%s1 + $0x8] sm:$0xff]
        %v278 = vld [vmem:[%s1 + $0x10] sm:$0xff]
        %v279 = vld [vmem:[%s1 + $0x18] sm:$0xff]
        %v280 = vld [vmem:[%s1 + $0x20] sm:$0xff]
        %v281 = vld [vmem:[%s1 + $0x28] sm:$0xff]
        %v282 = vld [vmem:[%s1 + $0x30] sm:$0xff]
        %v283 = vld [vmem:[%s1 + $0x38] sm:$0xff]
        %v284 = vld [vmem:[%s1 + $0x40] sm:$0xff]
        %v285 = vld [vmem:[%s1 + $0x48] sm:$0xff]
        %v286 = vld [vmem:[%s1 + $0x50] sm:$0xff]
        %v287 = vld [vmem:[%s1 + $0x58] sm:$0xff]
        %v288 = vld [vmem:[%s1 + $0x60] sm:$0xff]
        %v289 = vld [vmem:[%s1 + $0x68] sm:$0xff]
        %v290 = vld [vmem:[%s1 + $0x70] sm:$0xff]
        %v291 = vld [vmem:[%s1 + $0x78] sm:$0xff]
        %293 = vset.pattern.permute.xlu0 0
        %294 = vperm.xlu0 %293, %v276
        %v295 = vpop.permute.xlu0 %294
        %298 = vset.pattern.permute.xlu0 0
        %299 = vperm.xlu0 %298, %v277
        %v300 = vpop.permute.xlu0 %299
        %303 = vset.pattern.permute.xlu0 0
        %304 = vperm.xlu0 %303, %v278
        %v305 = vpop.permute.xlu0 %304
        %308 = vset.pattern.permute.xlu0 0
        %309 = vperm.xlu0 %308, %v279
        %v310 = vpop.permute.xlu0 %309
        %313 = vset.pattern.permute.xlu0 0
        %314 = vperm.xlu0 %313, %v280
        %v315 = vpop.permute.xlu0 %314
        %318 = vset.pattern.permute.xlu0 0
        %319 = vperm.xlu0 %318, %v281
        %v320 = vpop.permute.xlu0 %319
        %323 = vset.pattern.permute.xlu0 0
        %324 = vperm.xlu0 %323, %v282
        %v325 = vpop.permute.xlu0 %324
        %328 = vset.pattern.permute.xlu0 0
        %329 = vperm.xlu0 %328, %v283
        %v330 = vpop.permute.xlu0 %329
        %333 = vset.pattern.permute.xlu0 0
        %334 = vperm.xlu0 %333, %v284
        %v335 = vpop.permute.xlu0 %334
        %338 = vset.pattern.permute.xlu0 0
        %339 = vperm.xlu0 %338, %v285
        %v340 = vpop.permute.xlu0 %339
        %343 = vset.pattern.permute.xlu0 0
        %344 = vperm.xlu0 %343, %v286
        %v345 = vpop.permute.xlu0 %344
        %348 = vset.pattern.permute.xlu0 0
        %349 = vperm.xlu0 %348, %v287
        %v350 = vpop.permute.xlu0 %349
        %353 = vset.pattern.permute.xlu0 0
        %354 = vperm.xlu0 %353, %v288
        %v355 = vpop.permute.xlu0 %354
        %358 = vset.pattern.permute.xlu0 0
        %359 = vperm.xlu0 %358, %v289
        %v360 = vpop.permute.xlu0 %359
        %363 = vset.pattern.permute.xlu0 0
        %364 = vperm.xlu0 %363, %v290
        %v365 = vpop.permute.xlu0 %364
        %368 = vset.pattern.permute.xlu0 0
        %369 = vperm.xlu0 %368, %v291
        %v370 = vpop.permute.xlu0 %369
        %v372 = vlaneseq
        %v373 = vshrl.u32 %v372, 7
        %v374 = vsub.s32 0, %v373
        %v375 = vrot.slane %v275, %v374
        %v376 = vmul.f32 %v295, %v375
        %v377 = vmul.f32 %v300, %v375
        %v378 = vmul.f32 %v305, %v375
        %v379 = vmul.f32 %v310, %v375
        %v380 = vmul.f32 %v315, %v375
        %v381 = vmul.f32 %v320, %v375
        %v382 = vmul.f32 %v325, %v375
        %v383 = vmul.f32 %v330, %v375
        %v384 = vmul.f32 %v335, %v375
        %v385 = vmul.f32 %v340, %v375
        %v386 = vmul.f32 %v345, %v375
        %v387 = vmul.f32 %v350, %v375
        %v388 = vmul.f32 %v355, %v375
        %v389 = vmul.f32 %v360, %v375
        %v390 = vmul.f32 %v365, %v375
        %v391 = vmul.f32 %v370, %v375
        %392 = vset.pattern.permute.xlu0 1
        %393 = vperm.xlu0 %392, %v276
        %v394 = vpop.permute.xlu0 %393
        %396 = vset.pattern.permute.xlu0 1
        %397 = vperm.xlu0 %396, %v277
        %v398 = vpop.permute.xlu0 %397
        %400 = vset.pattern.permute.xlu0 1
        %401 = vperm.xlu0 %400, %v278
        %v402 = vpop.permute.xlu0 %401
        %404 = vset.pattern.permute.xlu0 1
        %405 = vperm.xlu0 %404, %v279
        %v406 = vpop.permute.xlu0 %405
        %408 = vset.pattern.permute.xlu0 1
        %409 = vperm.xlu0 %408, %v280
        %v410 = vpop.permute.xlu0 %409
        %412 = vset.pattern.permute.xlu0 1
        %413 = vperm.xlu0 %412, %v281
        %v414 = vpop.permute.xlu0 %413
        %416 = vset.pattern.permute.xlu0 1
        %417 = vperm.xlu0 %416, %v282
        %v418 = vpop.permute.xlu0 %417
        %420 = vset.pattern.permute.xlu0 1
        %421 = vperm.xlu0 %420, %v283
        %v422 = vpop.permute.xlu0 %421
        %424 = vset.pattern.permute.xlu0 1
        %425 = vperm.xlu0 %424, %v284
        %v426 = vpop.permute.xlu0 %425
        %428 = vset.pattern.permute.xlu0 1
        %429 = vperm.xlu0 %428, %v285
        %v430 = vpop.permute.xlu0 %429
        %432 = vset.pattern.permute.xlu0 1
        %433 = vperm.xlu0 %432, %v286
        %v434 = vpop.permute.xlu0 %433
        %436 = vset.pattern.permute.xlu0 1
        %437 = vperm.xlu0 %436, %v287
        %v438 = vpop.permute.xlu0 %437
        %440 = vset.pattern.permute.xlu0 1
        %441 = vperm.xlu0 %440, %v288
        %v442 = vpop.permute.xlu0 %441
        %444 = vset.pattern.permute.xlu0 1
        %445 = vperm.xlu0 %444, %v289
        %v446 = vpop.permute.xlu0 %445
        %448 = vset.pattern.permute.xlu0 1
        %449 = vperm.xlu0 %448, %v290
        %v450 = vpop.permute.xlu0 %449
        %452 = vset.pattern.permute.xlu0 1
        %453 = vperm.xlu0 %452, %v291
        %v454 = vpop.permute.xlu0 %453
        %v456 = vlaneseq
        %v457 = vshrl.u32 %v456, 7
        %v458 = vsub.s32 1, %v457
        %v459 = vrot.slane %v275, %v458
        %v460 = vmul.f32 %v394, %v459
        %v461 = vmul.f32 %v398, %v459
        %v462 = vmul.f32 %v402, %v459
        %v463 = vmul.f32 %v406, %v459
        %v464 = vmul.f32 %v410, %v459
        %v465 = vmul.f32 %v414, %v459
        %v466 = vmul.f32 %v418, %v459
        %v467 = vmul.f32 %v422, %v459
        %v468 = vmul.f32 %v426, %v459
        %v469 = vmul.f32 %v430, %v459
        %v470 = vmul.f32 %v434, %v459
        %v471 = vmul.f32 %v438, %v459
        %v472 = vmul.f32 %v442, %v459
        %v473 = vmul.f32 %v446, %v459
        %v474 = vmul.f32 %v450, %v459
        %v475 = vmul.f32 %v454, %v459
        %v476 = vadd.f32 %v376, %v460
        %v477 = vadd.f32 %v377, %v461
        %v478 = vadd.f32 %v378, %v462
        %v479 = vadd.f32 %v379, %v463
        %v480 = vadd.f32 %v380, %v464
        %v481 = vadd.f32 %v381, %v465
        %v482 = vadd.f32 %v382, %v466
        %v483 = vadd.f32 %v383, %v467
        %v484 = vadd.f32 %v384, %v468
        %v485 = vadd.f32 %v385, %v469
        %v486 = vadd.f32 %v386, %v470
        %v487 = vadd.f32 %v387, %v471
        %v488 = vadd.f32 %v388, %v472
        %v489 = vadd.f32 %v389, %v473
        %v490 = vadd.f32 %v390, %v474
        %v491 = vadd.f32 %v391, %v475
        %492 = vset.pattern.permute.xlu0 2
        %493 = vperm.xlu0 %492, %v276
        %v494 = vpop.permute.xlu0 %493
        %496 = vset.pattern.permute.xlu0 2
        %497 = vperm.xlu0 %496, %v277
        %v498 = vpop.permute.xlu0 %497
        %500 = vset.pattern.permute.xlu0 2
        %501 = vperm.xlu0 %500, %v278
        %v502 = vpop.permute.xlu0 %501
        %504 = vset.pattern.permute.xlu0 2
        %505 = vperm.xlu0 %504, %v279
        %v506 = vpop.permute.xlu0 %505
        %508 = vset.pattern.permute.xlu0 2
        %509 = vperm.xlu0 %508, %v280
        %v510 = vpop.permute.xlu0 %509
        %512 = vset.pattern.permute.xlu0 2
        %513 = vperm.xlu0 %512, %v281
        %v514 = vpop.permute.xlu0 %513
        %516 = vset.pattern.permute.xlu0 2
        %517 = vperm.xlu0 %516, %v282
        %v518 = vpop.permute.xlu0 %517
        %520 = vset.pattern.permute.xlu0 2
        %521 = vperm.xlu0 %520, %v283
        %v522 = vpop.permute.xlu0 %521
        %524 = vset.pattern.permute.xlu0 2
        %525 = vperm.xlu0 %524, %v284
        %v526 = vpop.permute.xlu0 %525
        %528 = vset.pattern.permute.xlu0 2
        %529 = vperm.xlu0 %528, %v285
        %v530 = vpop.permute.xlu0 %529
        %532 = vset.pattern.permute.xlu0 2
        %533 = vperm.xlu0 %532, %v286
        %v534 = vpop.permute.xlu0 %533
        %536 = vset.pattern.permute.xlu0 2
        %537 = vperm.xlu0 %536, %v287
        %v538 = vpop.permute.xlu0 %537
        %540 = vset.pattern.permute.xlu0 2
        %541 = vperm.xlu0 %540, %v288
        %v542 = vpop.permute.xlu0 %541
        %544 = vset.pattern.permute.xlu0 2
        %545 = vperm.xlu0 %544, %v289
        %v546 = vpop.permute.xlu0 %545
        %548 = vset.pattern.permute.xlu0 2
        %549 = vperm.xlu0 %548, %v290
        %v550 = vpop.permute.xlu0 %549
        %552 = vset.pattern.permute.xlu0 2
        %553 = vperm.xlu0 %552, %v291
        %v554 = vpop.permute.xlu0 %553
        %v556 = vlaneseq
        %v557 = vshrl.u32 %v556, 7
        %v558 = vsub.s32 2, %v557
        %v559 = vrot.slane %v275, %v558
        %v560 = vmul.f32 %v494, %v559
        %v561 = vmul.f32 %v498, %v559
        %v562 = vmul.f32 %v502, %v559
        %v563 = vmul.f32 %v506, %v559
        %v564 = vmul.f32 %v510, %v559
        %v565 = vmul.f32 %v514, %v559
        %v566 = vmul.f32 %v518, %v559
        %v567 = vmul.f32 %v522, %v559
        %v568 = vmul.f32 %v526, %v559
        %v569 = vmul.f32 %v530, %v559
        %v570 = vmul.f32 %v534, %v559
        %v571 = vmul.f32 %v538, %v559
        %v572 = vmul.f32 %v542, %v559
        %v573 = vmul.f32 %v546, %v559
        %v574 = vmul.f32 %v550, %v559
        %v575 = vmul.f32 %v554, %v559
        %v576 = vadd.f32 %v476, %v560
        %v577 = vadd.f32 %v477, %v561
        %v578 = vadd.f32 %v478, %v562
        %v579 = vadd.f32 %v479, %v563
        %v580 = vadd.f32 %v480, %v564
        %v581 = vadd.f32 %v481, %v565
        %v582 = vadd.f32 %v482, %v566
        %v583 = vadd.f32 %v483, %v567
        %v584 = vadd.f32 %v484, %v568
        %v585 = vadd.f32 %v485, %v569
        %v586 = vadd.f32 %v486, %v570
        %v587 = vadd.f32 %v487, %v571
        %v588 = vadd.f32 %v488, %v572
        %v589 = vadd.f32 %v489, %v573
        %v590 = vadd.f32 %v490, %v574
        %v591 = vadd.f32 %v491, %v575
        %592 = vset.pattern.permute.xlu0 3
        %593 = vperm.xlu0 %592, %v276
        %v594 = vpop.permute.xlu0 %593
        %596 = vset.pattern.permute.xlu0 3
        %597 = vperm.xlu0 %596, %v277
        %v598 = vpop.permute.xlu0 %597
        %600 = vset.pattern.permute.xlu0 3
        %601 = vperm.xlu0 %600, %v278
        %v602 = vpop.permute.xlu0 %601
        %604 = vset.pattern.permute.xlu0 3
        %605 = vperm.xlu0 %604, %v279
        %v606 = vpop.permute.xlu0 %605
        %608 = vset.pattern.permute.xlu0 3
        %609 = vperm.xlu0 %608, %v280
        %v610 = vpop.permute.xlu0 %609
        %612 = vset.pattern.permute.xlu0 3
        %613 = vperm.xlu0 %612, %v281
        %v614 = vpop.permute.xlu0 %613
        %616 = vset.pattern.permute.xlu0 3
        %617 = vperm.xlu0 %616, %v282
        %v618 = vpop.permute.xlu0 %617
        %620 = vset.pattern.permute.xlu0 3
        %621 = vperm.xlu0 %620, %v283
        %v622 = vpop.permute.xlu0 %621
        %624 = vset.pattern.permute.xlu0 3
        %625 = vperm.xlu0 %624, %v284
        %v626 = vpop.permute.xlu0 %625
        %628 = vset.pattern.permute.xlu0 3
        %629 = vperm.xlu0 %628, %v285
        %v630 = vpop.permute.xlu0 %629
        %632 = vset.pattern.permute.xlu0 3
        %633 = vperm.xlu0 %632, %v286
        %v634 = vpop.permute.xlu0 %633
        %636 = vset.pattern.permute.xlu0 3
        %637 = vperm.xlu0 %636, %v287
        %v638 = vpop.permute.xlu0 %637
        %640 = vset.pattern.permute.xlu0 3
        %641 = vperm.xlu0 %640, %v288
        %v642 = vpop.permute.xlu0 %641
        %644 = vset.pattern.permute.xlu0 3
        %645 = vperm.xlu0 %644, %v289
        %v646 = vpop.permute.xlu0 %645
        %648 = vset.pattern.permute.xlu0 3
        %649 = vperm.xlu0 %648, %v290
        %v650 = vpop.permute.xlu0 %649
        %652 = vset.pattern.permute.xlu0 3
        %653 = vperm.xlu0 %652, %v291
        %v654 = vpop.permute.xlu0 %653
        %v656 = vlaneseq
        %v657 = vshrl.u32 %v656, 7
        %v658 = vsub.s32 3, %v657
        %v659 = vrot.slane %v275, %v658
        %v660 = vmul.f32 %v594, %v659
        %v661 = vmul.f32 %v598, %v659
        %v662 = vmul.f32 %v602, %v659
        %v663 = vmul.f32 %v606, %v659
        %v664 = vmul.f32 %v610, %v659
        %v665 = vmul.f32 %v614, %v659
        %v666 = vmul.f32 %v618, %v659
        %v667 = vmul.f32 %v622, %v659
        %v668 = vmul.f32 %v626, %v659
        %v669 = vmul.f32 %v630, %v659
        %v670 = vmul.f32 %v634, %v659
        %v671 = vmul.f32 %v638, %v659
        %v672 = vmul.f32 %v642, %v659
        %v673 = vmul.f32 %v646, %v659
        %v674 = vmul.f32 %v650, %v659
        %v675 = vmul.f32 %v654, %v659
        %v676 = vadd.f32 %v576, %v660
        %v677 = vadd.f32 %v577, %v661
        %v678 = vadd.f32 %v578, %v662
        %v679 = vadd.f32 %v579, %v663
        %v680 = vadd.f32 %v580, %v664
        %v681 = vadd.f32 %v581, %v665
        %v682 = vadd.f32 %v582, %v666
        %v683 = vadd.f32 %v583, %v667
        %v684 = vadd.f32 %v584, %v668
        %v685 = vadd.f32 %v585, %v669
        %v686 = vadd.f32 %v586, %v670
        %v687 = vadd.f32 %v587, %v671
        %v688 = vadd.f32 %v588, %v672
        %v689 = vadd.f32 %v589, %v673
        %v690 = vadd.f32 %v590, %v674
        %v691 = vadd.f32 %v591, %v675
        %v692 = vld [vmem:[%s2] sm:$0xff]
        %v693 = vld [vmem:[%s2 + $0x8] sm:$0xff]
        %v694 = vld [vmem:[%s2 + $0x10] sm:$0xff]
        %v695 = vld [vmem:[%s2 + $0x18] sm:$0xff]
        %v696 = vld [vmem:[%s2 + $0x20] sm:$0xff]
        %v697 = vld [vmem:[%s2 + $0x28] sm:$0xff]
        %v698 = vld [vmem:[%s2 + $0x30] sm:$0xff]
        %v699 = vld [vmem:[%s2 + $0x38] sm:$0xff]
        %v700 = vld [vmem:[%s2 + $0x40] sm:$0xff]
        %v701 = vld [vmem:[%s2 + $0x48] sm:$0xff]
        %v702 = vld [vmem:[%s2 + $0x50] sm:$0xff]
        %v703 = vld [vmem:[%s2 + $0x58] sm:$0xff]
        %v704 = vld [vmem:[%s2 + $0x60] sm:$0xff]
        %v705 = vld [vmem:[%s2 + $0x68] sm:$0xff]
        %v706 = vld [vmem:[%s2 + $0x70] sm:$0xff]
        %v707 = vld [vmem:[%s2 + $0x78] sm:$0xff]
        %709 = vset.pattern.permute.xlu0 0
        %710 = vperm.xlu0 %709, %v692
        %v711 = vpop.permute.xlu0 %710
        %714 = vset.pattern.permute.xlu0 0
        %715 = vperm.xlu0 %714, %v693
        %v716 = vpop.permute.xlu0 %715
        %719 = vset.pattern.permute.xlu0 0
        %720 = vperm.xlu0 %719, %v694
        %v721 = vpop.permute.xlu0 %720
        %724 = vset.pattern.permute.xlu0 0
        %725 = vperm.xlu0 %724, %v695
        %v726 = vpop.permute.xlu0 %725
        %729 = vset.pattern.permute.xlu0 0
        %730 = vperm.xlu0 %729, %v696
        %v731 = vpop.permute.xlu0 %730
        %734 = vset.pattern.permute.xlu0 0
        %735 = vperm.xlu0 %734, %v697
        %v736 = vpop.permute.xlu0 %735
        %739 = vset.pattern.permute.xlu0 0
        %740 = vperm.xlu0 %739, %v698
        %v741 = vpop.permute.xlu0 %740
        %744 = vset.pattern.permute.xlu0 0
        %745 = vperm.xlu0 %744, %v699
        %v746 = vpop.permute.xlu0 %745
        %749 = vset.pattern.permute.xlu0 0
        %750 = vperm.xlu0 %749, %v700
        %v751 = vpop.permute.xlu0 %750
        %754 = vset.pattern.permute.xlu0 0
        %755 = vperm.xlu0 %754, %v701
        %v756 = vpop.permute.xlu0 %755
        %759 = vset.pattern.permute.xlu0 0
        %760 = vperm.xlu0 %759, %v702
        %v761 = vpop.permute.xlu0 %760
        %764 = vset.pattern.permute.xlu0 0
        %765 = vperm.xlu0 %764, %v703
        %v766 = vpop.permute.xlu0 %765
        %769 = vset.pattern.permute.xlu0 0
        %770 = vperm.xlu0 %769, %v704
        %v771 = vpop.permute.xlu0 %770
        %774 = vset.pattern.permute.xlu0 0
        %775 = vperm.xlu0 %774, %v705
        %v776 = vpop.permute.xlu0 %775
        %779 = vset.pattern.permute.xlu0 0
        %780 = vperm.xlu0 %779, %v706
        %v781 = vpop.permute.xlu0 %780
        %784 = vset.pattern.permute.xlu0 0
        %785 = vperm.xlu0 %784, %v707
        %v786 = vpop.permute.xlu0 %785
        %v788 = vadd.f32 %v676, %v711
        %v789 = vadd.f32 %v677, %v716
        %v790 = vadd.f32 %v678, %v721
        %v791 = vadd.f32 %v679, %v726
        %v792 = vadd.f32 %v680, %v731
        %v793 = vadd.f32 %v681, %v736
        %v794 = vadd.f32 %v682, %v741
        %v795 = vadd.f32 %v683, %v746
        %v796 = vadd.f32 %v684, %v751
        %v797 = vadd.f32 %v685, %v756
        %v798 = vadd.f32 %v686, %v761
        %v799 = vadd.f32 %v687, %v766
        %v800 = vadd.f32 %v688, %v771
        %v801 = vadd.f32 %v689, %v776
        %v802 = vadd.f32 %v690, %v781
        %v803 = vadd.f32 %v691, %v786
        %v804 = vmul.f32 %v788, 0.01
        %v805 = vmul.f32 %v789, 0.01
        %v806 = vmul.f32 %v790, 0.01
        %v807 = vmul.f32 %v791, 0.01
        %v808 = vmul.f32 %v792, 0.01
        %v809 = vmul.f32 %v793, 0.01
        %v810 = vmul.f32 %v794, 0.01
        %v811 = vmul.f32 %v795, 0.01
        %v812 = vmul.f32 %v796, 0.01
        %v813 = vmul.f32 %v797, 0.01
        %v814 = vmul.f32 %v798, 0.01
        %v815 = vmul.f32 %v799, 0.01
        %v816 = vmul.f32 %v800, 0.01
        %v817 = vmul.f32 %v801, 0.01
        %v818 = vmul.f32 %v802, 0.01
        %v819 = vmul.f32 %v803, 0.01
        %v820 = vmax.f32 %v788, %v804
        %v821 = vmax.f32 %v789, %v805
        %v822 = vmax.f32 %v790, %v806
        %v823 = vmax.f32 %v791, %v807
        %v824 = vmax.f32 %v792, %v808
        %v825 = vmax.f32 %v793, %v809
        %v826 = vmax.f32 %v794, %v810
        %v827 = vmax.f32 %v795, %v811
        %v828 = vmax.f32 %v796, %v812
        %v829 = vmax.f32 %v797, %v813
        %v830 = vmax.f32 %v798, %v814
        %v831 = vmax.f32 %v799, %v815
        %v832 = vmax.f32 %v800, %v816
        %v833 = vmax.f32 %v801, %v817
        %v834 = vmax.f32 %v802, %v818
        %v835 = vmax.f32 %v803, %v819
        %v836 = vld [vmem:[%s3] sm:$0xf]
        %v837 = vld [vmem:[%s3 + $0x4] sm:$0xf]
        %v838 = vld [vmem:[%s3 + $0x8] sm:$0xf]
        %v839 = vld [vmem:[%s3 + $0xc] sm:$0xf]
        %v840 = vld [vmem:[%s3 + $0x10] sm:$0xf]
        %v841 = vld [vmem:[%s3 + $0x14] sm:$0xf]
        %v842 = vld [vmem:[%s3 + $0x18] sm:$0xf]
        %v843 = vld [vmem:[%s3 + $0x1c] sm:$0xf]
        %v844 = vpack.c.bf16 %v821, %v820
        %v845 = vpack.c.bf16 %v823, %v822
        %v846 = vpack.c.bf16 %v825, %v824
        %v847 = vpack.c.bf16 %v827, %v826
        %v848 = vpack.c.bf16 %v829, %v828
        %v849 = vpack.c.bf16 %v831, %v830
        %v850 = vpack.c.bf16 %v833, %v832
        %v851 = vpack.c.bf16 %v835, %v834
        %v852 = vld [vmem:[%s4] sm:$0xff]
        %v853 = vld [vmem:[%s4 + $0x8] sm:$0xff]
        %v854 = vld [vmem:[%s4 + $0x10] sm:$0xff]
        %v855 = vld [vmem:[%s4 + $0x18] sm:$0xff]
        %v856 = vld [vmem:[%s4 + $0x20] sm:$0xff]
        %v857 = vld [vmem:[%s4 + $0x28] sm:$0xff]
        %v858 = vld [vmem:[%s4 + $0x30] sm:$0xff]
        %v859 = vld [vmem:[%s4 + $0x38] sm:$0xff]
        %861 = vset.pattern.permute.xlu0 0
        %862 = vperm.xlu0 %861, %v852
        %v863 = vpop.permute.xlu0 %862
        %866 = vset.pattern.permute.xlu0 0
        %867 = vperm.xlu0 %866, %v853
        %v868 = vpop.permute.xlu0 %867
        %871 = vset.pattern.permute.xlu0 0
        %872 = vperm.xlu0 %871, %v854
        %v873 = vpop.permute.xlu0 %872
        %876 = vset.pattern.permute.xlu0 0
        %877 = vperm.xlu0 %876, %v855
        %v878 = vpop.permute.xlu0 %877
        %881 = vset.pattern.permute.xlu0 0
        %882 = vperm.xlu0 %881, %v856
        %v883 = vpop.permute.xlu0 %882
        %886 = vset.pattern.permute.xlu0 0
        %887 = vperm.xlu0 %886, %v857
        %v888 = vpop.permute.xlu0 %887
        %891 = vset.pattern.permute.xlu0 0
        %892 = vperm.xlu0 %891, %v858
        %v893 = vpop.permute.xlu0 %892
        %896 = vset.pattern.permute.xlu0 0
        %897 = vperm.xlu0 %896, %v859
        %v898 = vpop.permute.xlu0 %897
        %v908 = vunpack.c.l.b16 %v836
        %v909 = vunpack.c.l.b16 %v837
        %v910 = vunpack.c.l.b16 %v838
        %v911 = vunpack.c.l.b16 %v839
        %v912 = vunpack.c.l.b16 %v840
        %v913 = vunpack.c.l.b16 %v841
        %v914 = vunpack.c.l.b16 %v842
        %v915 = vunpack.c.l.b16 %v843
        %v916 = vpack.c.b16 %v909, %v908
        %v917 = vpack.c.b16 %v911, %v910
        %v918 = vpack.c.b16 %v913, %v912
        %v919 = vpack.c.b16 %v915, %v914
        %924 = vmatprep.subr.bf16.mxu0 0
        %925 = vmatpush1.bf16.msra.mxu0 %v844
        %926 = vmatprep.subr.bf16.mxu0 0
        %927 = vmatpush1.bf16.msra.mxu0 %v845
        %928 = vmatprep.subr.bf16.mxu0 0
        %929 = vmatpush1.bf16.msra.mxu0 %v846
        %930 = vmatprep.subr.bf16.mxu0 0
        %931 = vmatpush1.bf16.msra.mxu0 %v847
        %932 = vmatprep.subr.bf16.mxu0 0
        %933 = vmatpush1.bf16.msra.mxu0 %v848
        %934 = vmatprep.subr.bf16.mxu0 0
        %935 = vmatpush1.bf16.msra.mxu0 %v849
        %936 = vmatprep.subr.bf16.mxu0 0
        %937 = vmatpush1.bf16.msra.mxu0 %v850
        %938 = vmatprep.subr.bf16.mxu0 0
        %939 = vmatpush1.bf16.msra.mxu0 %v851
        %940 = vmatprep.subr.bf16.mxu0 0
        %941 = vmatpush1.bf16.msra.mxu0 0
        %942 = vmatprep.subr.bf16.mxu0 0
        %943 = vmatpush1.bf16.msra.mxu0 0
        %944 = vmatprep.subr.bf16.mxu0 0
        %945 = vmatpush1.bf16.msra.mxu0 0
        %946 = vmatprep.subr.bf16.mxu0 0
        %947 = vmatpush1.bf16.msra.mxu0 0
        %948 = vmatprep.subr.bf16.mxu0 0
        %949 = vmatpush1.bf16.msra.mxu0 0
        %950 = vmatprep.subr.bf16.mxu0 0
        %951 = vmatpush1.bf16.msra.mxu0 0
        %952 = vmatprep.subr.bf16.mxu0 0
        %953 = vmatpush1.bf16.msra.mxu0 0
        %954 = vmatprep.subr.bf16.mxu0 0
        %955 = vmatpush1.bf16.msra.mxu0 0
        %956 = vmatprep.mubr.bf16.mxu0 0
        %957 = vmatmul.mubr.bf16.gmra.mrb[0].mxu0 %v916
        %v958 = vpop.f32.mrb[0].mxu0
        %v959 = vadd.f32 %v863, %v958
        %v960 = vpop.f32.mrb[0].mxu0
        %v961 = vpop.f32.mrb[0].mxu0
        %v962 = vadd.f32 %v868, %v961
        %v963 = vpop.f32.mrb[0].mxu0
        %964 = vmatprep.mubr.bf16.mxu0 0
        %965 = vmatmul.mubr.bf16.gmra.mrb[0].mxu0 %v917
        %v966 = vpop.f32.mrb[0].mxu0
        %v967 = vadd.f32 %v873, %v966
        %v968 = vpop.f32.mrb[0].mxu0
        %v969 = vpop.f32.mrb[0].mxu0
        %v970 = vadd.f32 %v878, %v969
        %v971 = vpop.f32.mrb[0].mxu0
        %972 = vmatprep.mubr.bf16.mxu0 0
        %973 = vmatmul.mubr.bf16.gmra.mrb[0].mxu0 %v918
        %v974 = vpop.f32.mrb[0].mxu0
        %v975 = vadd.f32 %v883, %v974
        %v976 = vpop.f32.mrb[0].mxu0
        %v977 = vpop.f32.mrb[0].mxu0
        %v978 = vadd.f32 %v888, %v977
        %v979 = vpop.f32.mrb[0].mxu0
        %980 = vmatprep.mubr.bf16.mxu0 0
        %981 = vmatmul.mubr.bf16.gmra.mrb[0].mxu0 %v919
        %v982 = vpop.f32.mrb[0].mxu0
        %v983 = vadd.f32 %v893, %v982
        %v984 = vpop.f32.mrb[0].mxu0
        %v985 = vpop.f32.mrb[0].mxu0
        %v986 = vadd.f32 %v898, %v985
        %v987 = vpop.f32.mrb[0].mxu0
        %988 = vdwg.mxu0
        %v989 = vmul.f32 %v959, 0.01
        %v990 = vmul.f32 %v962, 0.01
        %v991 = vmul.f32 %v967, 0.01
        %v992 = vmul.f32 %v970, 0.01
        %v993 = vmul.f32 %v975, 0.01
        %v994 = vmul.f32 %v978, 0.01
        %v995 = vmul.f32 %v983, 0.01
        %v996 = vmul.f32 %v986, 0.01
        %v997 = vmax.f32 %v959, %v989
        %v998 = vmax.f32 %v962, %v990
        %v999 = vmax.f32 %v967, %v991
        %v1000 = vmax.f32 %v970, %v992
        %v1001 = vmax.f32 %v975, %v993
        %v1002 = vmax.f32 %v978, %v994
        %v1003 = vmax.f32 %v983, %v995
        %v1004 = vmax.f32 %v986, %v996
        %v1005 = vld [vmem:[%s5] sm:$0xff]
        %v1006 = vld [vmem:[%s5 + $0x8] sm:$0xff]
        %v1007 = vld [vmem:[%s5 + $0x10] sm:$0xff]
        %v1008 = vld [vmem:[%s5 + $0x18] sm:$0xff]
        %v1009 = vld [vmem:[%s5 + $0x20] sm:$0xff]
        %v1010 = vld [vmem:[%s5 + $0x28] sm:$0xff]
        %v1011 = vld [vmem:[%s5 + $0x30] sm:$0xff]
        %v1012 = vld [vmem:[%s5 + $0x38] sm:$0xff]
        %1014 = vset.pattern.permute.xlu0 0
        %1015 = vperm.xlu0 %1014, %v1005
        %v1016 = vpop.permute.xlu0 %1015
        %1019 = vset.pattern.permute.xlu0 0
        %1020 = vperm.xlu0 %1019, %v1006
        %v1021 = vpop.permute.xlu0 %1020
        %1024 = vset.pattern.permute.xlu0 0
        %1025 = vperm.xlu0 %1024, %v1007
        %v1026 = vpop.permute.xlu0 %1025
        %1029 = vset.pattern.permute.xlu0 0
        %1030 = vperm.xlu0 %1029, %v1008
        %v1031 = vpop.permute.xlu0 %1030
        %1034 = vset.pattern.permute.xlu0 0
        %1035 = vperm.xlu0 %1034, %v1009
        %v1036 = vpop.permute.xlu0 %1035
        %1039 = vset.pattern.permute.xlu0 0
        %1040 = vperm.xlu0 %1039, %v1010
        %v1041 = vpop.permute.xlu0 %1040
        %1044 = vset.pattern.permute.xlu0 0
        %1045 = vperm.xlu0 %1044, %v1011
        %v1046 = vpop.permute.xlu0 %1045
        %1049 = vset.pattern.permute.xlu0 0
        %1050 = vperm.xlu0 %1049, %v1012
        %v1051 = vpop.permute.xlu0 %1050
        %v1053 = vmul.f32 %v997, %v1016
        %v1054 = vmul.f32 %v998, %v1021
        %v1055 = vmul.f32 %v999, %v1026
        %v1056 = vmul.f32 %v1000, %v1031
        %v1057 = vmul.f32 %v1001, %v1036
        %v1058 = vmul.f32 %v1002, %v1041
        %v1059 = vmul.f32 %v1003, %v1046
        %v1060 = vmul.f32 %v1004, %v1051
        %v1061 = vadd.f32 %v1053, %v1054
        %v1062 = vadd.f32 %v1061, %v1055
        %v1063 = vadd.f32 %v1062, %v1056
        %v1064 = vadd.f32 %v1063, %v1057
        %v1065 = vadd.f32 %v1064, %v1058
        %v1066 = vadd.f32 %v1065, %v1059
        %v1067 = vadd.f32 %v1066, %v1060
        %v1068 = vrot.slane %v1067, 4
        %v1069 = vadd.f32 %v1067, %v1068
        %v1070 = vrot.slane %v1069, 2
        %v1071 = vadd.f32 %v1069, %v1070
        %v1072 = vrot.slane %v1071, 1
        %v1073 = vadd.f32 %v1071, %v1072
        %s1074 = sld [smem:[#allocation2]]
        %v1075 = vstv %s1074
        %v1076 = vadd.f32 %v1073, %v1075
        %1077 = vst [vmem:[%s269] sm:$0x1] %v1076
        %s1078 = sand.u32 %s182, 1
        %s1079 = scalar_lea.sflag [#allocation4], %s1078
        %s1080 = sand.u32 %s182, 1
        %s1081 = scalar_lea.vmem [#allocation3], %s1080
        // Predicated region
        $region49: #{tpu_custom_call.1} parent=47 // pred_check
          %p1082 = pneg %p192
        $region50: #{tpu_custom_call.1} parent=47 // pred_check_branch
          %1084 = sbr.rel (%p1082) target = $region52
        $region51: #{tpu_custom_call.1} parent=47 // pred_region
          %s1086 = ssub.s32 16, 16
          %1087 = vsyncadd %s1079, %s1086
          %s1088 = smul.addr %s22, 16
          %s1089 = scalar_lea.hbm %s7, %s1088
          %s1091 = sshll.u32 %s1081, 4
          %s1092 = int_to_ptr.vmem [resolvable:$true] %s1091
          %1094 = dma.vmem_to_hbm [thread:$0]  %s1092, 16, %s1089, %s1079
        $region52: #{tpu_custom_call.1} parent=47 // pred_fallthru
          _
      $region48: #{tpu_custom_call.1} parent=5 // pred_fallthru
        _
      %p1095 = scmp.le.s32.totalorder 2, %s17
      // Predicated region
      $region53: #{tpu_custom_call.1} parent=5 // pred_check
        %p1096 = pneg %p1095
      $region54: #{tpu_custom_call.1} parent=5 // pred_check_branch
        %1098 = sbr.rel (%p1096) target = $region56
      $region55: #{tpu_custom_call.1} parent=5 // pred_region
        %s1099 = ssub.s32 %s17, 2
        // Predicated region
        $region57: #{tpu_custom_call.1} parent=55 // pred_check
          %p1100 = pneg %p198
        $region58: #{tpu_custom_call.1} parent=55 // pred_check_branch
          %1102 = sbr.rel (%p1100) target = $region60
        $region59: #{tpu_custom_call.1} parent=55 // pred_region
          %s1103 = sand.u32 %s183, 1
          %s1104 = scalar_lea.sflag [#allocation4], %s1103
          %s1105 = sand.u32 %s183, 1
          %s1106 = scalar_lea.vmem [#allocation3], %s1105
          %1107 = dma.done %s1104, 16
        $region60: #{tpu_custom_call.1} parent=55 // pred_fallthru
          _
      $region56: #{tpu_custom_call.1} parent=5 // pred_fallthru
        _
    $region6: #{tpu_custom_call.1} parent=1 // loop_footer
      %s21 = sadd.s32 1, %s17
    $region7: #{tpu_custom_call.1} parent=1 // loop_footer_branch
      %16 = sbr.rel target = $region3
    $region8: #{tpu_custom_call.1} parent=1 // loop_exit
      _
    %1108 = vsyncpa [#allocation4], 1
    %s1109 = scalar_lea.sflag [#allocation4], 1
    %1110 = vsyncpa %s1109, 1

</llo_original>
